<compile_context>
chip_gen: v7x
topology: tpu7x:2x2x1
jax: 0.10.0
libtpu: 0.0.40
codegen_flags: <defaults>
</compile_context>

<pallas_src>
import jax
import jax.numpy as jnp
from jax import lax
from jax.experimental import pallas as pl
from jax.experimental.pallas import tpu as pltpu


def _nconv_kernel(x_ref, a_ref, o_ref):
    # x_ref: (tb, W, tl)   tb batch slabs, full contraction dim W, lane tile tl
    # a_ref: (tv, W)       row tile of the adjacency (resident across steps)
    # o_ref: (tb, tv, tl)
    a = a_ref[...]
    tb = x_ref.shape[0]

    def body(i, carry):
        acc = jnp.dot(a, x_ref[i], preferred_element_type=jnp.float32)   # MXU, f32 acc
        o_ref[i] = acc.astype(o_ref.dtype)
        return carry

    lax.fori_loop(0, tb, body, 0, unroll=min(tb, 8))


def _sublane_align(dtype) -> int:
    # 8 for f32, 16 for bf16, 32 for int8/fp8 (sub-32-bit dtypes pack along sublanes).
    return max(8, 32 // jnp.dtype(dtype).itemsize)


def _pick_divisor_tile(dim: int, preferred: int, align: int) -> int:
    """Largest t <= preferred with dim % t == 0 and t % align == 0; else the full dim
    (always a legal TPU block extent)."""
    if dim <= preferred:
        return dim
    t = (preferred // align) * align
    while t >= align:
        if dim % t == 0:
            return t
        t -= align
    return dim


def _pick_batch_tile(B: int, slab_bytes: int, budget_bytes: int) -> int:
    tb = max(1, min(B, budget_bytes // max(slab_bytes, 1)))
    while B % tb:
        tb -= 1
    return tb


def nconv(x, A, *, tv_pref: int = 256, tl_pref: int = 2048,
          small_a_bytes: int = 4 << 20, slab_budget_bytes: int = 4 << 20):
    """x: (N, C, W, L), A: (V, W) -> (N, C, V, L).

    Equivalent to torch.einsum('ncwl,vw->ncvl', x, A)."""
    N, C, W, L = x.shape
    V, W2 = A.shape
    assert W == W2, "contraction dims of x and A must match"
    out_dtype = jnp.promote_types(x.dtype, A.dtype)

    B = N * C
    xb = x.reshape(B, W, L)                      # contiguous view, no HBM traffic

    bx = jnp.dtype(x.dtype).itemsize
    ba = jnp.dtype(A.dtype).itemsize
    bo = jnp.dtype(out_dtype).itemsize

    # Lane tile: keep stores lane-dense (multiple of 128) or take the full L.
    tl = _pick_divisor_tile(L, tl_pref, 128)

    # Adjacency row tile: keep the whole adjacency VMEM-resident when small so x is
    # read from HBM exactly once; otherwise tile V with dtype-aware sublane alignment.
    if V * W * ba <= small_a_bytes:
        tv = V
    else:
        tv = _pick_divisor_tile(V, tv_pref, _sublane_align(A.dtype))

    # Batch tile: per-step x+out slab ~ slab_budget (account for in-kernel f32 upcast).
    slab_bytes = W * tl * max(bx, 4) + tv * tl * max(bo, 4)
    tb = _pick_batch_tile(B, slab_bytes, slab_budget_bytes)

    # Explicit VMEM budget: double-buffered x/out/A blocks + f32 accumulator + margin.
    # Raises v5e's 16 MiB scoped default when needed, stays well inside v7x's 64 MiB.
    x_blk = tb * W * tl * bx
    o_blk = tb * tv * tl * bo
    a_blk = tv * W * ba
    footprint = 2 * (x_blk + o_blk + a_blk) + tb * tv * tl * 4
    vmem_limit = int(min(max(footprint * 3 // 2 + (2 << 20), 16 << 20), 48 << 20))

    cost = pl.CostEstimate(
        flops=2 * B * V * W * L,
        transcendentals=0,
        bytes_accessed=B * W * L * bx + V * W * ba + B * V * L * bo,
    )

    if tv == V:
        # No V tiling: x and out touched exactly once, A resident (same block index
        # every step -> its DMA is skipped after the first iteration).
        grid = (B // tb, L // tl)
        in_specs = [
            pl.BlockSpec((tb, W, tl), lambda b, l: (b, 0, l)),
            pl.BlockSpec((V, W), lambda b, l: (0, 0)),
        ]
        out_specs = pl.BlockSpec((tb, V, tl), lambda b, l: (b, 0, l))
        dims = ("parallel", "parallel")
    else:
        # V innermost: x's block index (b, 0, l) is unchanged across consecutive v
        # steps, so Pallas skips its DMA and only the small (tv, W) A tile re-streams.
        # Mark the reuse axis "arbitrary" so megacore sharding doesn't split it.
        grid = (B // tb, L // tl, V // tv)
        in_specs = [
            pl.BlockSpec((tb, W, tl), lambda b, l, v: (b, 0, l)),
            pl.BlockSpec((tv, W), lambda b, l, v: (v, 0)),
        ]
        out_specs = pl.BlockSpec((tb, tv, tl), lambda b, l, v: (b, v, l))
        dims = ("parallel", "parallel", "arbitrary")

    out = pl.pallas_call(
        _nconv_kernel,
        out_shape=jax.ShapeDtypeStruct((B, V, L), out_dtype),
        grid_spec=pltpu.PrefetchScalarGridSpec(
            num_scalar_prefetch=0,
            grid=grid,
            in_specs=in_specs,
            out_specs=out_specs,
        ),
        compiler_params=pltpu.CompilerParams(
            dimension_semantics=dims,
            vmem_limit_bytes=vmem_limit,
        ),
        cost_estimate=cost,
    )(xb, A)

    return out.reshape(N, C, V, L)


if __name__ == "__main__":
    # Small shapes implied by the forward: batch=2, channels=4, nodes (W=V)=16, seq=8.
    N, C, W, L = 2, 4, 16, 8
    V = 16

    key = jax.random.PRNGKey(0)
    kx, ka = jax.random.split(key)
    x = jax.random.normal(kx, (N, C, W, L), dtype=jnp.float32)
    A = jax.random.normal(ka, (V, W), dtype=jnp.float32)

    out = nconv(x, A)
    out = jax.block_until_ready(out)

    # Pure-JAX reference (same einsum as the torch module).
    ref = jnp.einsum("ncwl,vw->ncvl", x, A)
    assert out.shape == (N, C, V, L)
    assert jnp.allclose(out, ref, atol=1e-5, rtol=1e-5), "mismatch vs reference"
    print("KERNEL_OK")
</pallas_src>

<mosaic_0001>
module attributes {stable_mosaic.version = 11 : i64} {
  func.func @_nconv_kernel(%arg0: i32, %arg1: i32, %arg2: memref<8x16x8xf32, #tpu.memory_space<vmem>>, %arg3: memref<16x16xf32, #tpu.memory_space<vmem>>, %arg4: memref<8x16x8xf32, #tpu.memory_space<vmem>>) attributes {dimension_semantics = [#tpu.dimension_semantics<parallel>, #tpu.dimension_semantics<parallel>], iteration_bounds = array<i64: 1, 1>, scalar_prefetch = 0 : i64, scratch_operands = 0 : i64, tpu.core_type = #tpu.core_type<tc>, window_params = [{transform_indices = @transform_0, window_bounds = array<i64: 8, 16, 8>}, {pipeline_mode = #tpu.pipeline_mode<synchronous>, transform_indices = @transform_1, window_bounds = array<i64: 16, 16>}, {transform_indices = @transform_2, window_bounds = array<i64: 8, 16, 8>}]} {
    %c0 = arith.constant 0 : index
    %c0_0 = arith.constant 0 : index
    %0 = vector.load %arg3[%c0, %c0_0] : memref<16x16xf32, #tpu.memory_space<vmem>>, vector<16x16xf32>
    %c0_i32 = arith.constant 0 : i32
    %1 = arith.index_cast %c0_i32 : i32 to index
    %c0_1 = arith.constant 0 : index
    %c0_2 = arith.constant 0 : index
    %2 = vector.load %arg2[%1, %c0_1, %c0_2] : memref<8x16x8xf32, #tpu.memory_space<vmem>>, vector<1x16x8xf32>
    %3 = vector.shape_cast %2 : vector<1x16x8xf32> to vector<16x8xf32>
    %cst = arith.constant dense<0.000000e+00> : vector<16x8xf32>
    %4 = tpu.matmul %0, %3, %cst {dimension_numbers = #tpu.dot_dimension_numbers<[1], [0], [0], [1], [0, 0, 1, 1], [], []>} : vector<16x16xf32>, vector<16x8xf32>, vector<16x8xf32> -> vector<16x8xf32>
    %5 = arith.index_cast %c0_i32 : i32 to index
    %c0_3 = arith.constant 0 : index
    %c0_4 = arith.constant 0 : index
    %6 = vector.load %arg4[%5, %c0_3, %c0_4] : memref<8x16x8xf32, #tpu.memory_space<vmem>>, vector<1x16x8xf32>
    %7 = vector.shape_cast %6 : vector<1x16x8xf32> to vector<16x8xf32>
    %8 = vector.shape_cast %4 : vector<16x8xf32> to vector<1x16x8xf32>
    tpu.vector_store %arg4[%5, %c0_3, %c0_4], %8 {strides = array<i32>} : memref<8x16x8xf32, #tpu.memory_space<vmem>>, vector<1x16x8xf32>,
    %c1_i32 = arith.constant 1 : i32
    %9 = arith.index_cast %c1_i32 : i32 to index
    %c0_5 = arith.constant 0 : index
    %c0_6 = arith.constant 0 : index
    %10 = vector.load %arg2[%9, %c0_5, %c0_6] : memref<8x16x8xf32, #tpu.memory_space<vmem>>, vector<1x16x8xf32>
    %11 = vector.shape_cast %10 : vector<1x16x8xf32> to vector<16x8xf32>
    %cst_7 = arith.constant dense<0.000000e+00> : vector<16x8xf32>
    %12 = tpu.matmul %0, %11, %cst_7 {dimension_numbers = #tpu.dot_dimension_numbers<[1], [0], [0], [1], [0, 0, 1, 1], [], []>} : vector<16x16xf32>, vector<16x8xf32>, vector<16x8xf32> -> vector<16x8xf32>
    %13 = arith.index_cast %c1_i32 : i32 to index
    %c0_8 = arith.constant 0 : index
    %c0_9 = arith.constant 0 : index
    %14 = vector.load %arg4[%13, %c0_8, %c0_9] : memref<8x16x8xf32, #tpu.memory_space<vmem>>, vector<1x16x8xf32>
    %15 = vector.shape_cast %14 : vector<1x16x8xf32> to vector<16x8xf32>
    %16 = vector.shape_cast %12 : vector<16x8xf32> to vector<1x16x8xf32>
    tpu.vector_store %arg4[%13, %c0_8, %c0_9], %16 {strides = array<i32>} : memref<8x16x8xf32, #tpu.memory_space<vmem>>, vector<1x16x8xf32>,
    %c2_i32 = arith.constant 2 : i32
    %17 = arith.index_cast %c2_i32 : i32 to index
    %c0_10 = arith.constant 0 : index
    %c0_11 = arith.constant 0 : index
    %18 = vector.load %arg2[%17, %c0_10, %c0_11] : memref<8x16x8xf32, #tpu.memory_space<vmem>>, vector<1x16x8xf32>
    %19 = vector.shape_cast %18 : vector<1x16x8xf32> to vector<16x8xf32>
    %cst_12 = arith.constant dense<0.000000e+00> : vector<16x8xf32>
    %20 = tpu.matmul %0, %19, %cst_12 {dimension_numbers = #tpu.dot_dimension_numbers<[1], [0], [0], [1], [0, 0, 1, 1], [], []>} : vector<16x16xf32>, vector<16x8xf32>, vector<16x8xf32> -> vector<16x8xf32>
    %21 = arith.index_cast %c2_i32 : i32 to index
    %c0_13 = arith.constant 0 : index
    %c0_14 = arith.constant 0 : index
    %22 = vector.load %arg4[%21, %c0_13, %c0_14] : memref<8x16x8xf32, #tpu.memory_space<vmem>>, vector<1x16x8xf32>
    %23 = vector.shape_cast %22 : vector<1x16x8xf32> to vector<16x8xf32>
    %24 = vector.shape_cast %20 : vector<16x8xf32> to vector<1x16x8xf32>
    tpu.vector_store %arg4[%21, %c0_13, %c0_14], %24 {strides = array<i32>} : memref<8x16x8xf32, #tpu.memory_space<vmem>>, vector<1x16x8xf32>,
    %c3_i32 = arith.constant 3 : i32
    %25 = arith.index_cast %c3_i32 : i32 to index
    %c0_15 = arith.constant 0 : index
    %c0_16 = arith.constant 0 : index
    %26 = vector.load %arg2[%25, %c0_15, %c0_16] : memref<8x16x8xf32, #tpu.memory_space<vmem>>, vector<1x16x8xf32>
    %27 = vector.shape_cast %26 : vector<1x16x8xf32> to vector<16x8xf32>
    %cst_17 = arith.constant dense<0.000000e+00> : vector<16x8xf32>
    %28 = tpu.matmul %0, %27, %cst_17 {dimension_numbers = #tpu.dot_dimension_numbers<[1], [0], [0], [1], [0, 0, 1, 1], [], []>} : vector<16x16xf32>, vector<16x8xf32>, vector<16x8xf32> -> vector<16x8xf32>
    %29 = arith.index_cast %c3_i32 : i32 to index
    %c0_18 = arith.constant 0 : index
    %c0_19 = arith.constant 0 : index
    %30 = vector.load %arg4[%29, %c0_18, %c0_19] : memref<8x16x8xf32, #tpu.memory_space<vmem>>, vector<1x16x8xf32>
    %31 = vector.shape_cast %30 : vector<1x16x8xf32> to vector<16x8xf32>
    %32 = vector.shape_cast %28 : vector<16x8xf32> to vector<1x16x8xf32>
    tpu.vector_store %arg4[%29, %c0_18, %c0_19], %32 {strides = array<i32>} : memref<8x16x8xf32, #tpu.memory_space<vmem>>, vector<1x16x8xf32>,
    %c4_i32 = arith.constant 4 : i32
    %33 = arith.index_cast %c4_i32 : i32 to index
    %c0_20 = arith.constant 0 : index
    %c0_21 = arith.constant 0 : index
    %34 = vector.load %arg2[%33, %c0_20, %c0_21] : memref<8x16x8xf32, #tpu.memory_space<vmem>>, vector<1x16x8xf32>
    %35 = vector.shape_cast %34 : vector<1x16x8xf32> to vector<16x8xf32>
    %cst_22 = arith.constant dense<0.000000e+00> : vector<16x8xf32>
    %36 = tpu.matmul %0, %35, %cst_22 {dimension_numbers = #tpu.dot_dimension_numbers<[1], [0], [0], [1], [0, 0, 1, 1], [], []>} : vector<16x16xf32>, vector<16x8xf32>, vector<16x8xf32> -> vector<16x8xf32>
    %37 = arith.index_cast %c4_i32 : i32 to index
    %c0_23 = arith.constant 0 : index
    %c0_24 = arith.constant 0 : index
    %38 = vector.load %arg4[%37, %c0_23, %c0_24] : memref<8x16x8xf32, #tpu.memory_space<vmem>>, vector<1x16x8xf32>
    %39 = vector.shape_cast %38 : vector<1x16x8xf32> to vector<16x8xf32>
    %40 = vector.shape_cast %36 : vector<16x8xf32> to vector<1x16x8xf32>
    tpu.vector_store %arg4[%37, %c0_23, %c0_24], %40 {strides = array<i32>} : memref<8x16x8xf32, #tpu.memory_space<vmem>>, vector<1x16x8xf32>,
    %c5_i32 = arith.constant 5 : i32
    %41 = arith.index_cast %c5_i32 : i32 to index
    %c0_25 = arith.constant 0 : index
    %c0_26 = arith.constant 0 : index
    %42 = vector.load %arg2[%41, %c0_25, %c0_26] : memref<8x16x8xf32, #tpu.memory_space<vmem>>, vector<1x16x8xf32>
    %43 = vector.shape_cast %42 : vector<1x16x8xf32> to vector<16x8xf32>
    %cst_27 = arith.constant dense<0.000000e+00> : vector<16x8xf32>
    %44 = tpu.matmul %0, %43, %cst_27 {dimension_numbers = #tpu.dot_dimension_numbers<[1], [0], [0], [1], [0, 0, 1, 1], [], []>} : vector<16x16xf32>, vector<16x8xf32>, vector<16x8xf32> -> vector<16x8xf32>
    %45 = arith.index_cast %c5_i32 : i32 to index
    %c0_28 = arith.constant 0 : index
    %c0_29 = arith.constant 0 : index
    %46 = vector.load %arg4[%45, %c0_28, %c0_29] : memref<8x16x8xf32, #tpu.memory_space<vmem>>, vector<1x16x8xf32>
    %47 = vector.shape_cast %46 : vector<1x16x8xf32> to vector<16x8xf32>
    %48 = vector.shape_cast %44 : vector<16x8xf32> to vector<1x16x8xf32>
    tpu.vector_store %arg4[%45, %c0_28, %c0_29], %48 {strides = array<i32>} : memref<8x16x8xf32, #tpu.memory_space<vmem>>, vector<1x16x8xf32>,
    %c6_i32 = arith.constant 6 : i32
    %49 = arith.index_cast %c6_i32 : i32 to index
    %c0_30 = arith.constant 0 : index
    %c0_31 = arith.constant 0 : index
    %50 = vector.load %arg2[%49, %c0_30, %c0_31] : memref<8x16x8xf32, #tpu.memory_space<vmem>>, vector<1x16x8xf32>
    %51 = vector.shape_cast %50 : vector<1x16x8xf32> to vector<16x8xf32>
    %cst_32 = arith.constant dense<0.000000e+00> : vector<16x8xf32>
    %52 = tpu.matmul %0, %51, %cst_32 {dimension_numbers = #tpu.dot_dimension_numbers<[1], [0], [0], [1], [0, 0, 1, 1], [], []>} : vector<16x16xf32>, vector<16x8xf32>, vector<16x8xf32> -> vector<16x8xf32>
    %53 = arith.index_cast %c6_i32 : i32 to index
    %c0_33 = arith.constant 0 : index
    %c0_34 = arith.constant 0 : index
    %54 = vector.load %arg4[%53, %c0_33, %c0_34] : memref<8x16x8xf32, #tpu.memory_space<vmem>>, vector<1x16x8xf32>
    %55 = vector.shape_cast %54 : vector<1x16x8xf32> to vector<16x8xf32>
    %56 = vector.shape_cast %52 : vector<16x8xf32> to vector<1x16x8xf32>
    tpu.vector_store %arg4[%53, %c0_33, %c0_34], %56 {strides = array<i32>} : memref<8x16x8xf32, #tpu.memory_space<vmem>>, vector<1x16x8xf32>,
    %c7_i32 = arith.constant 7 : i32
    %57 = arith.index_cast %c7_i32 : i32 to index
    %c0_35 = arith.constant 0 : index
    %c0_36 = arith.constant 0 : index
    %58 = vector.load %arg2[%57, %c0_35, %c0_36] : memref<8x16x8xf32, #tpu.memory_space<vmem>>, vector<1x16x8xf32>
    %59 = vector.shape_cast %58 : vector<1x16x8xf32> to vector<16x8xf32>
    %cst_37 = arith.constant dense<0.000000e+00> : vector<16x8xf32>
    %60 = tpu.matmul %0, %59, %cst_37 {dimension_numbers = #tpu.dot_dimension_numbers<[1], [0], [0], [1], [0, 0, 1, 1], [], []>} : vector<16x16xf32>, vector<16x8xf32>, vector<16x8xf32> -> vector<16x8xf32>
    %61 = arith.index_cast %c7_i32 : i32 to index
    %c0_38 = arith.constant 0 : index
    %c0_39 = arith.constant 0 : index
    %62 = vector.load %arg4[%61, %c0_38, %c0_39] : memref<8x16x8xf32, #tpu.memory_space<vmem>>, vector<1x16x8xf32>
    %63 = vector.shape_cast %62 : vector<1x16x8xf32> to vector<16x8xf32>
    %64 = vector.shape_cast %60 : vector<16x8xf32> to vector<1x16x8xf32>
    tpu.vector_store %arg4[%61, %c0_38, %c0_39], %64 {strides = array<i32>} : memref<8x16x8xf32, #tpu.memory_space<vmem>>, vector<1x16x8xf32>,
    %c8_i32 = arith.constant 8 : i32
    return
  }
  func.func @transform_0(%arg0: i32, %arg1: i32) -> (i32, i32, i32) {
    %c0_i32 = arith.constant 0 : i32
    %c0_i32_0 = arith.constant 0 : i32
    return %arg0, %c0_i32, %arg1 : i32, i32, i32
  }
  func.func @transform_1(%arg0: i32, %arg1: i32) -> (i32, i32) {
    %c0_i32 = arith.constant 0 : i32
    %c0_i32_0 = arith.constant 0 : i32
    %c0_i32_1 = arith.constant 0 : i32
    return %c0_i32, %c0_i32_0 : i32, i32
  }
  func.func @transform_2(%arg0: i32, %arg1: i32) -> (i32, i32, i32) {
    %c0_i32 = arith.constant 0 : i32
    %c0_i32_0 = arith.constant 0 : i32
    return %arg0, %c0_i32, %arg1 : i32, i32, i32
  }
}

</mosaic_0001>

<llo_original>
// kernel: tpu_custom_call.1
$region0: #{tpu_custom_call.1}
  #allocation0 [shape = 'u32[]', space=smem, size = 0x4, offset = 0x4, fixed_abs, tag = 'smem constant byte address 0x4 - core index']
  #allocation1 [shape = 'u32[144,128]{1,0:T(1,128)}', space=vmem, size = 0x12000, scoped, tag = 'internal scratch']
  %s0 = inlined_call_operand.vmem [shape: f32[8,16,8], index: 0, kind: input, shape index: {}]
  %s1 = inlined_call_operand.vmem [shape: f32[16,16], index: 1, kind: input, shape index: {}]
  %s2 = inlined_call_operand.vmem [shape: f32[8,16,8], index: 2, kind: output, shape index: {}]
  %s3 = sld [smem:[#allocation0]]
  $region18: #{tpu_custom_call.1} parent=0
    _
  %s5 = ssub.s32 1, %s3
  %s6 = scalar_select 0, %s5, %s3
  // Predicated region
  $region2: #{tpu_custom_call.1} parent=0 // pred_check
    _
  $region3: #{tpu_custom_call.1} parent=0 // pred_check_branch
    %8 = sbr.rel (0) target = $region5
  $region4: #{tpu_custom_call.1} parent=0 // pred_region
    _
  $region5: #{tpu_custom_call.1} parent=0 // pred_fallthru
    _
  // Predicated region
  $region6: #{tpu_custom_call.1} parent=0 // pred_check
    _
  $region7: #{tpu_custom_call.1} parent=0 // pred_check_branch
    %10 = sbr.rel (0) target = $region9
  $region8: #{tpu_custom_call.1} parent=0 // pred_region
    _
  $region9: #{tpu_custom_call.1} parent=0 // pred_fallthru
    _
  %v11 = vld [vmem:[%s1] sm:$0xff]
  %v12 = vld [vmem:[%s1 + $0x8] sm:$0xff]
  %v13 = vld [vmem:[%s0] sm:$0xff]
  %v14 = vld [vmem:[%s0 + $0x8] sm:$0xff]
  %vm15 = vcmask 130048
  %v17 = vsel %vm15, %v11, 0
  %v20 = vsel %vm15, %v12, 0
  %22 = vmatprep.subr.mxu0 0.0
  %23 = vmatpush1.msra.mxu0 %v13
  %24 = vmatprep.subr.mxu0 0.0
  %25 = vmatpush1.msra.mxu0 %v14
  %26 = vmatprep.subr.mxu0 0.0
  %27 = vmatpush1.msra.mxu0 0.0
  %28 = vmatprep.subr.mxu0 0.0
  %29 = vmatpush1.msra.mxu0 0.0
  %30 = vmatprep.subr.mxu0 0.0
  %31 = vmatpush1.msra.mxu0 0.0
  %32 = vmatprep.subr.mxu0 0.0
  %33 = vmatpush1.msra.mxu0 0.0
  %34 = vmatprep.subr.mxu0 0.0
  %35 = vmatpush1.msra.mxu0 0.0
  %36 = vmatprep.subr.mxu0 0.0
  %37 = vmatpush1.msra.mxu0 0.0
  %38 = vmatprep.subr.mxu0 0.0
  %39 = vmatpush1.msra.mxu0 0.0
  %40 = vmatprep.subr.mxu0 0.0
  %41 = vmatpush1.msra.mxu0 0.0
  %42 = vmatprep.subr.mxu0 0.0
  %43 = vmatpush1.msra.mxu0 0.0
  %44 = vmatprep.subr.mxu0 0.0
  %45 = vmatpush1.msra.mxu0 0.0
  %46 = vmatprep.subr.mxu0 0.0
  %47 = vmatpush1.msra.mxu0 0.0
  %48 = vmatprep.subr.mxu0 0.0
  %49 = vmatpush1.msra.mxu0 0.0
  %50 = vmatprep.subr.mxu0 0.0
  %51 = vmatpush1.msra.mxu0 0.0
  %52 = vmatprep.subr.mxu0 0.0
  %53 = vmatpush1.msra.mxu0 0.0
  %54 = vmatprep.subr.mxu0 0.0
  %55 = vmatpush1.msra.mxu0 0.0
  %56 = vmatprep.subr.mxu0 0.0
  %57 = vmatpush1.msra.mxu0 0.0
  %58 = vmatprep.subr.mxu0 0.0
  %59 = vmatpush1.msra.mxu0 0.0
  %60 = vmatprep.subr.mxu0 0.0
  %61 = vmatpush1.msra.mxu0 0.0
  %62 = vmatprep.subr.mxu0 0.0
  %63 = vmatpush1.msra.mxu0 0.0
  %64 = vmatprep.subr.mxu0 0.0
  %65 = vmatpush1.msra.mxu0 0.0
  %66 = vmatprep.subr.mxu0 0.0
  %67 = vmatpush1.msra.mxu0 0.0
  %68 = vmatprep.subr.mxu0 0.0
  %69 = vmatpush1.msra.mxu0 0.0
  %70 = vmatprep.subr.mxu0 0.0
  %71 = vmatpush1.msra.mxu0 0.0
  %72 = vmatprep.subr.mxu0 0.0
  %73 = vmatpush1.msra.mxu0 0.0
  %74 = vmatprep.subr.mxu0 0.0
  %75 = vmatpush1.msra.mxu0 0.0
  %76 = vmatprep.subr.mxu0 0.0
  %77 = vmatpush1.msra.mxu0 0.0
  %78 = vmatprep.subr.mxu0 0.0
  %79 = vmatpush1.msra.mxu0 0.0
  %80 = vmatprep.subr.mxu0 0.0
  %81 = vmatpush1.msra.mxu0 0.0
  %82 = vmatprep.subr.mxu0 0.0
  %83 = vmatpush1.msra.mxu0 0.0
  %84 = vmatprep.subr.mxu0 0.0
  %85 = vmatpush1.msra.mxu0 0.0
  %86 = vmatprep.mubr.f32.mxu0 0.0
  %87 = vmatmul.mubr.f32.gmra.mrb[0].mxu0 %v17
  %v88 = vpop.f32.mrb[0].mxu0
  %v89 = vadd.f32 0.0, %v88
  %v90 = vpop.f32.mrb[0].mxu0
  %91 = vmatprep.mubr.f32.mxu0 0.0
  %92 = vmatmul.mubr.f32.gmra.mrb[0].mxu0 %v20
  %v93 = vpop.f32.mrb[0].mxu0
  %v94 = vadd.f32 0.0, %v93
  %v95 = vpop.f32.mrb[0].mxu0
  %96 = vdwg.mxu0
  %vm97 = vcmask 64512
  %98 = vst.msk [vmem:[%s2] sm:$0xff] %vm97, %v89
  %99 = vst.msk [vmem:[%s2 + $0x8] sm:$0xff] %vm97, %v94
  %s100 = scalar_lea.vmem %s0, 16
  %v101 = vld [vmem:[%s100] sm:$0xff]
  %v102 = vld [vmem:[%s100 + $0x8] sm:$0xff]
  %103 = vmatprep.subr.mxu0 0.0
  %104 = vmatpush1.msra.mxu0 %v101
  %105 = vmatprep.subr.mxu0 0.0
  %106 = vmatpush1.msra.mxu0 %v102
  %107 = vmatprep.subr.mxu0 0.0
  %108 = vmatpush1.msra.mxu0 0.0
  %109 = vmatprep.subr.mxu0 0.0
  %110 = vmatpush1.msra.mxu0 0.0
  %111 = vmatprep.subr.mxu0 0.0
  %112 = vmatpush1.msra.mxu0 0.0
  %113 = vmatprep.subr.mxu0 0.0
  %114 = vmatpush1.msra.mxu0 0.0
  %115 = vmatprep.subr.mxu0 0.0
  %116 = vmatpush1.msra.mxu0 0.0
  %117 = vmatprep.subr.mxu0 0.0
  %118 = vmatpush1.msra.mxu0 0.0
  %119 = vmatprep.subr.mxu0 0.0
  %120 = vmatpush1.msra.mxu0 0.0
  %121 = vmatprep.subr.mxu0 0.0
  %122 = vmatpush1.msra.mxu0 0.0
  %123 = vmatprep.subr.mxu0 0.0
  %124 = vmatpush1.msra.mxu0 0.0
  %125 = vmatprep.subr.mxu0 0.0
  %126 = vmatpush1.msra.mxu0 0.0
  %127 = vmatprep.subr.mxu0 0.0
  %128 = vmatpush1.msra.mxu0 0.0
  %129 = vmatprep.subr.mxu0 0.0
  %130 = vmatpush1.msra.mxu0 0.0
  %131 = vmatprep.subr.mxu0 0.0
  %132 = vmatpush1.msra.mxu0 0.0
  %133 = vmatprep.subr.mxu0 0.0
  %134 = vmatpush1.msra.mxu0 0.0
  %135 = vmatprep.subr.mxu0 0.0
  %136 = vmatpush1.msra.mxu0 0.0
  %137 = vmatprep.subr.mxu0 0.0
  %138 = vmatpush1.msra.mxu0 0.0
  %139 = vmatprep.subr.mxu0 0.0
  %140 = vmatpush1.msra.mxu0 0.0
  %141 = vmatprep.subr.mxu0 0.0
  %142 = vmatpush1.msra.mxu0 0.0
  %143 = vmatprep.subr.mxu0 0.0
  %144 = vmatpush1.msra.mxu0 0.0
  %145 = vmatprep.subr.mxu0 0.0
  %146 = vmatpush1.msra.mxu0 0.0
  %147 = vmatprep.subr.mxu0 0.0
  %148 = vmatpush1.msra.mxu0 0.0
  %149 = vmatprep.subr.mxu0 0.0
  %150 = vmatpush1.msra.mxu0 0.0
  %151 = vmatprep.subr.mxu0 0.0
  %152 = vmatpush1.msra.mxu0 0.0
  %153 = vmatprep.subr.mxu0 0.0
  %154 = vmatpush1.msra.mxu0 0.0
  %155 = vmatprep.subr.mxu0 0.0
  %156 = vmatpush1.msra.mxu0 0.0
  %157 = vmatprep.subr.mxu0 0.0
  %158 = vmatpush1.msra.mxu0 0.0
  %159 = vmatprep.subr.mxu0 0.0
  %160 = vmatpush1.msra.mxu0 0.0
  %161 = vmatprep.subr.mxu0 0.0
  %162 = vmatpush1.msra.mxu0 0.0
  %163 = vmatprep.subr.mxu0 0.0
  %164 = vmatpush1.msra.mxu0 0.0
  %165 = vmatprep.subr.mxu0 0.0
  %166 = vmatpush1.msra.mxu0 0.0
  %167 = vmatprep.mubr.f32.mxu0 0.0
  %168 = vmatmul.mubr.f32.gmra.mrb[0].mxu0 %v17
  %v169 = vpop.f32.mrb[0].mxu0
  %v170 = vadd.f32 0.0, %v169
  %v171 = vpop.f32.mrb[0].mxu0
  %172 = vmatprep.mubr.f32.mxu0 0.0
  %173 = vmatmul.mubr.f32.gmra.mrb[0].mxu0 %v20
  %v174 = vpop.f32.mrb[0].mxu0
  %v175 = vadd.f32 0.0, %v174
  %v176 = vpop.f32.mrb[0].mxu0
  %177 = vdwg.mxu0
  %s178 = scalar_lea.vmem %s2, 16
  %179 = vst.msk [vmem:[%s178] sm:$0xff] %vm97, %v170
  %180 = vst.msk [vmem:[%s178 + $0x8] sm:$0xff] %vm97, %v175
  %s181 = scalar_lea.vmem %s0, 32
  %v182 = vld [vmem:[%s181] sm:$0xff]
  %v183 = vld [vmem:[%s181 + $0x8] sm:$0xff]
  %184 = vmatprep.subr.mxu0 0.0
  %185 = vmatpush1.msra.mxu0 %v182
  %186 = vmatprep.subr.mxu0 0.0
  %187 = vmatpush1.msra.mxu0 %v183
  %188 = vmatprep.subr.mxu0 0.0
  %189 = vmatpush1.msra.mxu0 0.0
  %190 = vmatprep.subr.mxu0 0.0
  %191 = vmatpush1.msra.mxu0 0.0
  %192 = vmatprep.subr.mxu0 0.0
  %193 = vmatpush1.msra.mxu0 0.0
  %194 = vmatprep.subr.mxu0 0.0
  %195 = vmatpush1.msra.mxu0 0.0
  %196 = vmatprep.subr.mxu0 0.0
  %197 = vmatpush1.msra.mxu0 0.0
  %198 = vmatprep.subr.mxu0 0.0
  %199 = vmatpush1.msra.mxu0 0.0
  %200 = vmatprep.subr.mxu0 0.0
  %201 = vmatpush1.msra.mxu0 0.0
  %202 = vmatprep.subr.mxu0 0.0
  %203 = vmatpush1.msra.mxu0 0.0
  %204 = vmatprep.subr.mxu0 0.0
  %205 = vmatpush1.msra.mxu0 0.0
  %206 = vmatprep.subr.mxu0 0.0
  %207 = vmatpush1.msra.mxu0 0.0
  %208 = vmatprep.subr.mxu0 0.0
  %209 = vmatpush1.msra.mxu0 0.0
  %210 = vmatprep.subr.mxu0 0.0
  %211 = vmatpush1.msra.mxu0 0.0
  %212 = vmatprep.subr.mxu0 0.0
  %213 = vmatpush1.msra.mxu0 0.0
  %214 = vmatprep.subr.mxu0 0.0
  %215 = vmatpush1.msra.mxu0 0.0
  %216 = vmatprep.subr.mxu0 0.0
  %217 = vmatpush1.msra.mxu0 0.0
  %218 = vmatprep.subr.mxu0 0.0
  %219 = vmatpush1.msra.mxu0 0.0
  %220 = vmatprep.subr.mxu0 0.0
  %221 = vmatpush1.msra.mxu0 0.0
  %222 = vmatprep.subr.mxu0 0.0
  %223 = vmatpush1.msra.mxu0 0.0
  %224 = vmatprep.subr.mxu0 0.0
  %225 = vmatpush1.msra.mxu0 0.0
  %226 = vmatprep.subr.mxu0 0.0
  %227 = vmatpush1.msra.mxu0 0.0
  %228 = vmatprep.subr.mxu0 0.0
  %229 = vmatpush1.msra.mxu0 0.0
  %230 = vmatprep.subr.mxu0 0.0
  %231 = vmatpush1.msra.mxu0 0.0
  %232 = vmatprep.subr.mxu0 0.0
  %233 = vmatpush1.msra.mxu0 0.0
  %234 = vmatprep.subr.mxu0 0.0
  %235 = vmatpush1.msra.mxu0 0.0
  %236 = vmatprep.subr.mxu0 0.0
  %237 = vmatpush1.msra.mxu0 0.0
  %238 = vmatprep.subr.mxu0 0.0
  %239 = vmatpush1.msra.mxu0 0.0
  %240 = vmatprep.subr.mxu0 0.0
  %241 = vmatpush1.msra.mxu0 0.0
  %242 = vmatprep.subr.mxu0 0.0
  %243 = vmatpush1.msra.mxu0 0.0
  %244 = vmatprep.subr.mxu0 0.0
  %245 = vmatpush1.msra.mxu0 0.0
  %246 = vmatprep.subr.mxu0 0.0
  %247 = vmatpush1.msra.mxu0 0.0
  %248 = vmatprep.mubr.f32.mxu0 0.0
  %249 = vmatmul.mubr.f32.gmra.mrb[0].mxu0 %v17
  %v250 = vpop.f32.mrb[0].mxu0
  %v251 = vadd.f32 0.0, %v250
  %v252 = vpop.f32.mrb[0].mxu0
  %253 = vmatprep.mubr.f32.mxu0 0.0
  %254 = vmatmul.mubr.f32.gmra.mrb[0].mxu0 %v20
  %v255 = vpop.f32.mrb[0].mxu0
  %v256 = vadd.f32 0.0, %v255
  %v257 = vpop.f32.mrb[0].mxu0
  %258 = vdwg.mxu0
  %s259 = scalar_lea.vmem %s2, 32
  %260 = vst.msk [vmem:[%s259] sm:$0xff] %vm97, %v251
  %261 = vst.msk [vmem:[%s259 + $0x8] sm:$0xff] %vm97, %v256
  %s262 = scalar_lea.vmem %s0, 48
  %v263 = vld [vmem:[%s262] sm:$0xff]
  %v264 = vld [vmem:[%s262 + $0x8] sm:$0xff]
  %265 = vmatprep.subr.mxu0 0.0
  %266 = vmatpush1.msra.mxu0 %v263
  %267 = vmatprep.subr.mxu0 0.0
  %268 = vmatpush1.msra.mxu0 %v264
  %269 = vmatprep.subr.mxu0 0.0
  %270 = vmatpush1.msra.mxu0 0.0
  %271 = vmatprep.subr.mxu0 0.0
  %272 = vmatpush1.msra.mxu0 0.0
  %273 = vmatprep.subr.mxu0 0.0
  %274 = vmatpush1.msra.mxu0 0.0
  %275 = vmatprep.subr.mxu0 0.0
  %276 = vmatpush1.msra.mxu0 0.0
  %277 = vmatprep.subr.mxu0 0.0
  %278 = vmatpush1.msra.mxu0 0.0
  %279 = vmatprep.subr.mxu0 0.0
  %280 = vmatpush1.msra.mxu0 0.0
  %281 = vmatprep.subr.mxu0 0.0
  %282 = vmatpush1.msra.mxu0 0.0
  %283 = vmatprep.subr.mxu0 0.0
  %284 = vmatpush1.msra.mxu0 0.0
  %285 = vmatprep.subr.mxu0 0.0
  %286 = vmatpush1.msra.mxu0 0.0
  %287 = vmatprep.subr.mxu0 0.0
  %288 = vmatpush1.msra.mxu0 0.0
  %289 = vmatprep.subr.mxu0 0.0
  %290 = vmatpush1.msra.mxu0 0.0
  %291 = vmatprep.subr.mxu0 0.0
  %292 = vmatpush1.msra.mxu0 0.0
  %293 = vmatprep.subr.mxu0 0.0
  %294 = vmatpush1.msra.mxu0 0.0
  %295 = vmatprep.subr.mxu0 0.0
  %296 = vmatpush1.msra.mxu0 0.0
  %297 = vmatprep.subr.mxu0 0.0
  %298 = vmatpush1.msra.mxu0 0.0
  %299 = vmatprep.subr.mxu0 0.0
  %300 = vmatpush1.msra.mxu0 0.0
  %301 = vmatprep.subr.mxu0 0.0
  %302 = vmatpush1.msra.mxu0 0.0
  %303 = vmatprep.subr.mxu0 0.0
  %304 = vmatpush1.msra.mxu0 0.0
  %305 = vmatprep.subr.mxu0 0.0
  %306 = vmatpush1.msra.mxu0 0.0
  %307 = vmatprep.subr.mxu0 0.0
  %308 = vmatpush1.msra.mxu0 0.0
  %309 = vmatprep.subr.mxu0 0.0
  %310 = vmatpush1.msra.mxu0 0.0
  %311 = vmatprep.subr.mxu0 0.0
  %312 = vmatpush1.msra.mxu0 0.0
  %313 = vmatprep.subr.mxu0 0.0
  %314 = vmatpush1.msra.mxu0 0.0
  %315 = vmatprep.subr.mxu0 0.0
  %316 = vmatpush1.msra.mxu0 0.0
  %317 = vmatprep.subr.mxu0 0.0
  %318 = vmatpush1.msra.mxu0 0.0
  %319 = vmatprep.subr.mxu0 0.0
  %320 = vmatpush1.msra.mxu0 0.0
  %321 = vmatprep.subr.mxu0 0.0
  %322 = vmatpush1.msra.mxu0 0.0
  %323 = vmatprep.subr.mxu0 0.0
  %324 = vmatpush1.msra.mxu0 0.0
  %325 = vmatprep.subr.mxu0 0.0
  %326 = vmatpush1.msra.mxu0 0.0
  %327 = vmatprep.subr.mxu0 0.0
  %328 = vmatpush1.msra.mxu0 0.0
  %329 = vmatprep.mubr.f32.mxu0 0.0
  %330 = vmatmul.mubr.f32.gmra.mrb[0].mxu0 %v17
  %v331 = vpop.f32.mrb[0].mxu0
  %v332 = vadd.f32 0.0, %v331
  %v333 = vpop.f32.mrb[0].mxu0
  %334 = vmatprep.mubr.f32.mxu0 0.0
  %335 = vmatmul.mubr.f32.gmra.mrb[0].mxu0 %v20
  %v336 = vpop.f32.mrb[0].mxu0
  %v337 = vadd.f32 0.0, %v336
  %v338 = vpop.f32.mrb[0].mxu0
  %339 = vdwg.mxu0
  %s340 = scalar_lea.vmem %s2, 48
  %341 = vst.msk [vmem:[%s340] sm:$0xff] %vm97, %v332
  %342 = vst.msk [vmem:[%s340 + $0x8] sm:$0xff] %vm97, %v337
  %s343 = scalar_lea.vmem %s0, 64
  %v344 = vld [vmem:[%s343] sm:$0xff]
  %v345 = vld [vmem:[%s343 + $0x8] sm:$0xff]
  %346 = vmatprep.subr.mxu0 0.0
  %347 = vmatpush1.msra.mxu0 %v344
  %348 = vmatprep.subr.mxu0 0.0
  %349 = vmatpush1.msra.mxu0 %v345
  %350 = vmatprep.subr.mxu0 0.0
  %351 = vmatpush1.msra.mxu0 0.0
  %352 = vmatprep.subr.mxu0 0.0
  %353 = vmatpush1.msra.mxu0 0.0
  %354 = vmatprep.subr.mxu0 0.0
  %355 = vmatpush1.msra.mxu0 0.0
  %356 = vmatprep.subr.mxu0 0.0
  %357 = vmatpush1.msra.mxu0 0.0
  %358 = vmatprep.subr.mxu0 0.0
  %359 = vmatpush1.msra.mxu0 0.0
  %360 = vmatprep.subr.mxu0 0.0
  %361 = vmatpush1.msra.mxu0 0.0
  %362 = vmatprep.subr.mxu0 0.0
  %363 = vmatpush1.msra.mxu0 0.0
  %364 = vmatprep.subr.mxu0 0.0
  %365 = vmatpush1.msra.mxu0 0.0
  %366 = vmatprep.subr.mxu0 0.0
  %367 = vmatpush1.msra.mxu0 0.0
  %368 = vmatprep.subr.mxu0 0.0
  %369 = vmatpush1.msra.mxu0 0.0
  %370 = vmatprep.subr.mxu0 0.0
  %371 = vmatpush1.msra.mxu0 0.0
  %372 = vmatprep.subr.mxu0 0.0
  %373 = vmatpush1.msra.mxu0 0.0
  %374 = vmatprep.subr.mxu0 0.0
  %375 = vmatpush1.msra.mxu0 0.0
  %376 = vmatprep.subr.mxu0 0.0
  %377 = vmatpush1.msra.mxu0 0.0
  %378 = vmatprep.subr.mxu0 0.0
  %379 = vmatpush1.msra.mxu0 0.0
  %380 = vmatprep.subr.mxu0 0.0
  %381 = vmatpush1.msra.mxu0 0.0
  %382 = vmatprep.subr.mxu0 0.0
  %383 = vmatpush1.msra.mxu0 0.0
  %384 = vmatprep.subr.mxu0 0.0
  %385 = vmatpush1.msra.mxu0 0.0
  %386 = vmatprep.subr.mxu0 0.0
  %387 = vmatpush1.msra.mxu0 0.0
  %388 = vmatprep.subr.mxu0 0.0
  %389 = vmatpush1.msra.mxu0 0.0
  %390 = vmatprep.subr.mxu0 0.0
  %391 = vmatpush1.msra.mxu0 0.0
  %392 = vmatprep.subr.mxu0 0.0
  %393 = vmatpush1.msra.mxu0 0.0
  %394 = vmatprep.subr.mxu0 0.0
  %395 = vmatpush1.msra.mxu0 0.0
  %396 = vmatprep.subr.mxu0 0.0
  %397 = vmatpush1.msra.mxu0 0.0
  %398 = vmatprep.subr.mxu0 0.0
  %399 = vmatpush1.msra.mxu0 0.0
  %400 = vmatprep.subr.mxu0 0.0
  %401 = vmatpush1.msra.mxu0 0.0
  %402 = vmatprep.subr.mxu0 0.0
  %403 = vmatpush1.msra.mxu0 0.0
  %404 = vmatprep.subr.mxu0 0.0
  %405 = vmatpush1.msra.mxu0 0.0
  %406 = vmatprep.subr.mxu0 0.0
  %407 = vmatpush1.msra.mxu0 0.0
  %408 = vmatprep.subr.mxu0 0.0
  %409 = vmatpush1.msra.mxu0 0.0
  %410 = vmatprep.mubr.f32.mxu0 0.0
  %411 = vmatmul.mubr.f32.gmra.mrb[0].mxu0 %v17
  %v412 = vpop.f32.mrb[0].mxu0
  %v413 = vadd.f32 0.0, %v412
  %v414 = vpop.f32.mrb[0].mxu0
  %415 = vmatprep.mubr.f32.mxu0 0.0
  %416 = vmatmul.mubr.f32.gmra.mrb[0].mxu0 %v20
  %v417 = vpop.f32.mrb[0].mxu0
  %v418 = vadd.f32 0.0, %v417
  %v419 = vpop.f32.mrb[0].mxu0
  %420 = vdwg.mxu0
  %s421 = scalar_lea.vmem %s2, 64
  %422 = vst.msk [vmem:[%s421] sm:$0xff] %vm97, %v413
  %423 = vst.msk [vmem:[%s421 + $0x8] sm:$0xff] %vm97, %v418
  %s424 = scalar_lea.vmem %s0, 80
  %v425 = vld [vmem:[%s424] sm:$0xff]
  %v426 = vld [vmem:[%s424 + $0x8] sm:$0xff]
  %427 = vmatprep.subr.mxu0 0.0
  %428 = vmatpush1.msra.mxu0 %v425
  %429 = vmatprep.subr.mxu0 0.0
  %430 = vmatpush1.msra.mxu0 %v426
  %431 = vmatprep.subr.mxu0 0.0
  %432 = vmatpush1.msra.mxu0 0.0
  %433 = vmatprep.subr.mxu0 0.0
  %434 = vmatpush1.msra.mxu0 0.0
  %435 = vmatprep.subr.mxu0 0.0
  %436 = vmatpush1.msra.mxu0 0.0
  %437 = vmatprep.subr.mxu0 0.0
  %438 = vmatpush1.msra.mxu0 0.0
  %439 = vmatprep.subr.mxu0 0.0
  %440 = vmatpush1.msra.mxu0 0.0
  %441 = vmatprep.subr.mxu0 0.0
  %442 = vmatpush1.msra.mxu0 0.0
  %443 = vmatprep.subr.mxu0 0.0
  %444 = vmatpush1.msra.mxu0 0.0
  %445 = vmatprep.subr.mxu0 0.0
  %446 = vmatpush1.msra.mxu0 0.0
  %447 = vmatprep.subr.mxu0 0.0
  %448 = vmatpush1.msra.mxu0 0.0
  %449 = vmatprep.subr.mxu0 0.0
  %450 = vmatpush1.msra.mxu0 0.0
  %451 = vmatprep.subr.mxu0 0.0
  %452 = vmatpush1.msra.mxu0 0.0
  %453 = vmatprep.subr.mxu0 0.0
  %454 = vmatpush1.msra.mxu0 0.0
  %455 = vmatprep.subr.mxu0 0.0
  %456 = vmatpush1.msra.mxu0 0.0
  %457 = vmatprep.subr.mxu0 0.0
  %458 = vmatpush1.msra.mxu0 0.0
  %459 = vmatprep.subr.mxu0 0.0
  %460 = vmatpush1.msra.mxu0 0.0
  %461 = vmatprep.subr.mxu0 0.0
  %462 = vmatpush1.msra.mxu0 0.0
  %463 = vmatprep.subr.mxu0 0.0
  %464 = vmatpush1.msra.mxu0 0.0
  %465 = vmatprep.subr.mxu0 0.0
  %466 = vmatpush1.msra.mxu0 0.0
  %467 = vmatprep.subr.mxu0 0.0
  %468 = vmatpush1.msra.mxu0 0.0
  %469 = vmatprep.subr.mxu0 0.0
  %470 = vmatpush1.msra.mxu0 0.0
  %471 = vmatprep.subr.mxu0 0.0
  %472 = vmatpush1.msra.mxu0 0.0
  %473 = vmatprep.subr.mxu0 0.0
  %474 = vmatpush1.msra.mxu0 0.0
  %475 = vmatprep.subr.mxu0 0.0
  %476 = vmatpush1.msra.mxu0 0.0
  %477 = vmatprep.subr.mxu0 0.0
  %478 = vmatpush1.msra.mxu0 0.0
  %479 = vmatprep.subr.mxu0 0.0
  %480 = vmatpush1.msra.mxu0 0.0
  %481 = vmatprep.subr.mxu0 0.0
  %482 = vmatpush1.msra.mxu0 0.0
  %483 = vmatprep.subr.mxu0 0.0
  %484 = vmatpush1.msra.mxu0 0.0
  %485 = vmatprep.subr.mxu0 0.0
  %486 = vmatpush1.msra.mxu0 0.0
  %487 = vmatprep.subr.mxu0 0.0
  %488 = vmatpush1.msra.mxu0 0.0
  %489 = vmatprep.subr.mxu0 0.0
  %490 = vmatpush1.msra.mxu0 0.0
  %491 = vmatprep.mubr.f32.mxu0 0.0
  %492 = vmatmul.mubr.f32.gmra.mrb[0].mxu0 %v17
  %v493 = vpop.f32.mrb[0].mxu0
  %v494 = vadd.f32 0.0, %v493
  %v495 = vpop.f32.mrb[0].mxu0
  %496 = vmatprep.mubr.f32.mxu0 0.0
  %497 = vmatmul.mubr.f32.gmra.mrb[0].mxu0 %v20
  %v498 = vpop.f32.mrb[0].mxu0
  %v499 = vadd.f32 0.0, %v498
  %v500 = vpop.f32.mrb[0].mxu0
  %501 = vdwg.mxu0
  %s502 = scalar_lea.vmem %s2, 80
  %503 = vst.msk [vmem:[%s502] sm:$0xff] %vm97, %v494
  %504 = vst.msk [vmem:[%s502 + $0x8] sm:$0xff] %vm97, %v499
  %s505 = scalar_lea.vmem %s0, 96
  %v506 = vld [vmem:[%s505] sm:$0xff]
  %v507 = vld [vmem:[%s505 + $0x8] sm:$0xff]
  %508 = vmatprep.subr.mxu0 0.0
  %509 = vmatpush1.msra.mxu0 %v506
  %510 = vmatprep.subr.mxu0 0.0
  %511 = vmatpush1.msra.mxu0 %v507
  %512 = vmatprep.subr.mxu0 0.0
  %513 = vmatpush1.msra.mxu0 0.0
  %514 = vmatprep.subr.mxu0 0.0
  %515 = vmatpush1.msra.mxu0 0.0
  %516 = vmatprep.subr.mxu0 0.0
  %517 = vmatpush1.msra.mxu0 0.0
  %518 = vmatprep.subr.mxu0 0.0
  %519 = vmatpush1.msra.mxu0 0.0
  %520 = vmatprep.subr.mxu0 0.0
  %521 = vmatpush1.msra.mxu0 0.0
  %522 = vmatprep.subr.mxu0 0.0
  %523 = vmatpush1.msra.mxu0 0.0
  %524 = vmatprep.subr.mxu0 0.0
  %525 = vmatpush1.msra.mxu0 0.0
  %526 = vmatprep.subr.mxu0 0.0
  %527 = vmatpush1.msra.mxu0 0.0
  %528 = vmatprep.subr.mxu0 0.0
  %529 = vmatpush1.msra.mxu0 0.0
  %530 = vmatprep.subr.mxu0 0.0
  %531 = vmatpush1.msra.mxu0 0.0
  %532 = vmatprep.subr.mxu0 0.0
  %533 = vmatpush1.msra.mxu0 0.0
  %534 = vmatprep.subr.mxu0 0.0
  %535 = vmatpush1.msra.mxu0 0.0
  %536 = vmatprep.subr.mxu0 0.0
  %537 = vmatpush1.msra.mxu0 0.0
  %538 = vmatprep.subr.mxu0 0.0
  %539 = vmatpush1.msra.mxu0 0.0
  %540 = vmatprep.subr.mxu0 0.0
  %541 = vmatpush1.msra.mxu0 0.0
  %542 = vmatprep.subr.mxu0 0.0
  %543 = vmatpush1.msra.mxu0 0.0
  %544 = vmatprep.subr.mxu0 0.0
  %545 = vmatpush1.msra.mxu0 0.0
  %546 = vmatprep.subr.mxu0 0.0
  %547 = vmatpush1.msra.mxu0 0.0
  %548 = vmatprep.subr.mxu0 0.0
  %549 = vmatpush1.msra.mxu0 0.0
  %550 = vmatprep.subr.mxu0 0.0
  %551 = vmatpush1.msra.mxu0 0.0
  %552 = vmatprep.subr.mxu0 0.0
  %553 = vmatpush1.msra.mxu0 0.0
  %554 = vmatprep.subr.mxu0 0.0
  %555 = vmatpush1.msra.mxu0 0.0
  %556 = vmatprep.subr.mxu0 0.0
  %557 = vmatpush1.msra.mxu0 0.0
  %558 = vmatprep.subr.mxu0 0.0
  %559 = vmatpush1.msra.mxu0 0.0
  %560 = vmatprep.subr.mxu0 0.0
  %561 = vmatpush1.msra.mxu0 0.0
  %562 = vmatprep.subr.mxu0 0.0
  %563 = vmatpush1.msra.mxu0 0.0
  %564 = vmatprep.subr.mxu0 0.0
  %565 = vmatpush1.msra.mxu0 0.0
  %566 = vmatprep.subr.mxu0 0.0
  %567 = vmatpush1.msra.mxu0 0.0
  %568 = vmatprep.subr.mxu0 0.0
  %569 = vmatpush1.msra.mxu0 0.0
  %570 = vmatprep.subr.mxu0 0.0
  %571 = vmatpush1.msra.mxu0 0.0
  %572 = vmatprep.mubr.f32.mxu0 0.0
  %573 = vmatmul.mubr.f32.gmra.mrb[0].mxu0 %v17
  %v574 = vpop.f32.mrb[0].mxu0
  %v575 = vadd.f32 0.0, %v574
  %v576 = vpop.f32.mrb[0].mxu0
  %577 = vmatprep.mubr.f32.mxu0 0.0
  %578 = vmatmul.mubr.f32.gmra.mrb[0].mxu0 %v20
  %v579 = vpop.f32.mrb[0].mxu0
  %v580 = vadd.f32 0.0, %v579
  %v581 = vpop.f32.mrb[0].mxu0
  %582 = vdwg.mxu0
  %s583 = scalar_lea.vmem %s2, 96
  %584 = vst.msk [vmem:[%s583] sm:$0xff] %vm97, %v575
  %585 = vst.msk [vmem:[%s583 + $0x8] sm:$0xff] %vm97, %v580
  %s586 = scalar_lea.vmem %s0, 112
  %v587 = vld [vmem:[%s586] sm:$0xff]
  %v588 = vld [vmem:[%s586 + $0x8] sm:$0xff]
  %589 = vmatprep.subr.mxu0 0.0
  %590 = vmatpush1.msra.mxu0 %v587
  %591 = vmatprep.subr.mxu0 0.0
  %592 = vmatpush1.msra.mxu0 %v588
  %593 = vmatprep.subr.mxu0 0.0
  %594 = vmatpush1.msra.mxu0 0.0
  %595 = vmatprep.subr.mxu0 0.0
  %596 = vmatpush1.msra.mxu0 0.0
  %597 = vmatprep.subr.mxu0 0.0
  %598 = vmatpush1.msra.mxu0 0.0
  %599 = vmatprep.subr.mxu0 0.0
  %600 = vmatpush1.msra.mxu0 0.0
  %601 = vmatprep.subr.mxu0 0.0
  %602 = vmatpush1.msra.mxu0 0.0
  %603 = vmatprep.subr.mxu0 0.0
  %604 = vmatpush1.msra.mxu0 0.0
  %605 = vmatprep.subr.mxu0 0.0
  %606 = vmatpush1.msra.mxu0 0.0
  %607 = vmatprep.subr.mxu0 0.0
  %608 = vmatpush1.msra.mxu0 0.0
  %609 = vmatprep.subr.mxu0 0.0
  %610 = vmatpush1.msra.mxu0 0.0
  %611 = vmatprep.subr.mxu0 0.0
  %612 = vmatpush1.msra.mxu0 0.0
  %613 = vmatprep.subr.mxu0 0.0
  %614 = vmatpush1.msra.mxu0 0.0
  %615 = vmatprep.subr.mxu0 0.0
  %616 = vmatpush1.msra.mxu0 0.0
  %617 = vmatprep.subr.mxu0 0.0
  %618 = vmatpush1.msra.mxu0 0.0
  %619 = vmatprep.subr.mxu0 0.0
  %620 = vmatpush1.msra.mxu0 0.0
  %621 = vmatprep.subr.mxu0 0.0
  %622 = vmatpush1.msra.mxu0 0.0
  %623 = vmatprep.subr.mxu0 0.0
  %624 = vmatpush1.msra.mxu0 0.0
  %625 = vmatprep.subr.mxu0 0.0
  %626 = vmatpush1.msra.mxu0 0.0
  %627 = vmatprep.subr.mxu0 0.0
  %628 = vmatpush1.msra.mxu0 0.0
  %629 = vmatprep.subr.mxu0 0.0
  %630 = vmatpush1.msra.mxu0 0.0
  %631 = vmatprep.subr.mxu0 0.0
  %632 = vmatpush1.msra.mxu0 0.0
  %633 = vmatprep.subr.mxu0 0.0
  %634 = vmatpush1.msra.mxu0 0.0
  %635 = vmatprep.subr.mxu0 0.0
  %636 = vmatpush1.msra.mxu0 0.0
  %637 = vmatprep.subr.mxu0 0.0
  %638 = vmatpush1.msra.mxu0 0.0
  %639 = vmatprep.subr.mxu0 0.0
  %640 = vmatpush1.msra.mxu0 0.0
  %641 = vmatprep.subr.mxu0 0.0
  %642 = vmatpush1.msra.mxu0 0.0
  %643 = vmatprep.subr.mxu0 0.0
  %644 = vmatpush1.msra.mxu0 0.0
  %645 = vmatprep.subr.mxu0 0.0
  %646 = vmatpush1.msra.mxu0 0.0
  %647 = vmatprep.subr.mxu0 0.0
  %648 = vmatpush1.msra.mxu0 0.0
  %649 = vmatprep.subr.mxu0 0.0
  %650 = vmatpush1.msra.mxu0 0.0
  %651 = vmatprep.subr.mxu0 0.0
  %652 = vmatpush1.msra.mxu0 0.0
  %653 = vmatprep.mubr.f32.mxu0 0.0
  %654 = vmatmul.mubr.f32.gmra.mrb[0].mxu0 %v17
  %v655 = vpop.f32.mrb[0].mxu0
  %v656 = vadd.f32 0.0, %v655
  %v657 = vpop.f32.mrb[0].mxu0
  %658 = vmatprep.mubr.f32.mxu0 0.0
  %659 = vmatmul.mubr.f32.gmra.mrb[0].mxu0 %v20
  %v660 = vpop.f32.mrb[0].mxu0
  %v661 = vadd.f32 0.0, %v660
  %v662 = vpop.f32.mrb[0].mxu0
  %663 = vdwg.mxu0
  %s664 = scalar_lea.vmem %s2, 112
  %665 = vst.msk [vmem:[%s664] sm:$0xff] %vm97, %v656
  %666 = vst.msk [vmem:[%s664 + $0x8] sm:$0xff] %vm97, %v661
  // Predicated region
  $region10: #{tpu_custom_call.1} parent=0 // pred_check
    _
  $region11: #{tpu_custom_call.1} parent=0 // pred_check_branch
    %668 = sbr.rel (0) target = $region13
  $region12: #{tpu_custom_call.1} parent=0 // pred_region
    _
  $region13: #{tpu_custom_call.1} parent=0 // pred_fallthru
    _
  // Predicated region
  $region14: #{tpu_custom_call.1} parent=0 // pred_check
    _
  $region15: #{tpu_custom_call.1} parent=0 // pred_check_branch
    %670 = sbr.rel (0) target = $region17
  $region16: #{tpu_custom_call.1} parent=0 // pred_region
    _
  $region17: #{tpu_custom_call.1} parent=0 // pred_fallthru
    _

</llo_original>
